<compile_context>
chip_gen: v7x
topology: tpu7x:2x2x1
jax: 0.10.0
libtpu: 0.0.40
codegen_flags: <defaults>
</compile_context>

<pallas_src>
import jax
import jax.numpy as jnp
from jax.experimental import pallas as pl
from jax.experimental.pallas import tpu as pltpu

LANE = 128                       # TPU lane width (last dim of a vreg)
DEFAULT_TILE_ROWS = 4096         # 4096 x 128 f32 = 2 MiB per block
VMEM_LIMIT_BYTES = 32 * 1024 * 1024   # safe on v5e/v6e/v7x, fits 6 live 2 MiB bufs


def _mask_fuse_kernel(img_ref, mask_ref, out_ref):
    """out = img * (1 - mask) + mask   (elementwise, whole VMEM tile).

    Mask is converted to the image dtype on the VPU (free: VPU slots have huge
    slack in this HBM-bound kernel).
    """
    img = img_ref[...]
    m = mask_ref[...].astype(img.dtype)
    out_ref[...] = img * (1.0 - m) + m


def masked_images_pallas(images, masks, *, tile_rows=DEFAULT_TILE_ROWS):
    """Compute images * (1 - masks) + masks with a tiled Pallas kernel.

    images: float array, any rank; total element count must be a multiple of
            LANE (=128).  True for 256x256 inpainting frames and the shapes
            used below.
    masks:  same shape as images, any dtype (float, int8/uint8/bool all fine);
            converted to the image dtype inside the kernel (no wrapper pass).
    tile_rows: rows per block of the (rows, 128) flattened view; must be a
            multiple of 32 so int8/uint8 mask blocks are legally tiled.
    """
    assert images.shape == masks.shape, "images and masks must have same shape"
    assert tile_rows % 32 == 0, "tile_rows must be a multiple of 32"

    orig_shape = images.shape
    total = images.size
    if total % LANE != 0:
        raise ValueError(
            f"total element count ({total}) must be a multiple of {LANE}")
    rows = total // LANE

    if rows <= tile_rows:
        # Single full-array block: whole working set (<= ~6 MiB double-buffered)
        # fits comfortably in VMEM on every TPU generation; zero grid overhead.
        tr = rows
    else:
        # Large lane-dense tiles; grid >= 2 so v7x's two TensorCores can both
        # stream under dimension_semantics=("parallel",).  Non-dividing last
        # block is handled by Pallas (padded read, masked write).
        tr = tile_rows

    grid = (pl.cdiv(rows, tr),)

    x2 = images.reshape(rows, LANE)
    m2 = masks.reshape(rows, LANE)   # reshape only: no wrapper-side cast/pass

    out2 = pl.pallas_call(
        _mask_fuse_kernel,
        out_shape=jax.ShapeDtypeStruct((rows, LANE), images.dtype),
        grid=grid,
        in_specs=[
            pl.BlockSpec((tr, LANE), lambda i: (i, 0)),
            pl.BlockSpec((tr, LANE), lambda i: (i, 0)),
        ],
        out_specs=pl.BlockSpec((tr, LANE), lambda i: (i, 0)),
        compiler_params=pltpu.CompilerParams(
            dimension_semantics=("parallel",),
            vmem_limit_bytes=VMEM_LIMIT_BYTES,
        ),
    )(x2, m2)
    return out2.reshape(orig_shape)


def inpainting_model_forward(images, masks, n_views):
    """JAX/Pallas equivalent of InpaintingModel.forward.

    images: (B, n_views*3, H, W) float (NCHW, PyTorch convention).
    masks:  (B, n_views*3, H, W), any dtype (binary 0/1 or soft float).
    """
    images_masked = masked_images_pallas(images, masks)
    # TODO(synk): self.generator(images_masked, n_views) — InpaintGenerator is
    # not defined in the provided module; identity pass-through used here.
    outputs = images_masked
    return outputs


def _reference(images, masks):
    m = masks.astype(images.dtype)
    return images * (1.0 - m) + m


if __name__ == "__main__":
    key = jax.random.PRNGKey(0)
    k_img, k_msk, k_img2, k_msk2 = jax.random.split(key, 4)

    # ---- primary (small) run: batch=2, n_views=2 -> C=6, spatial 16x16 ------
    B, n_views, H, W = 2, 2, 16, 16
    C = n_views * 3
    images = jax.random.uniform(k_img, (B, C, H, W), dtype=jnp.float32)
    # binary masks carried as int8 -> 4x less mask HBM read, converted in-kernel
    masks = (jax.random.uniform(k_msk, (B, C, H, W)) > 0.5).astype(jnp.int8)

    out = inpainting_model_forward(images, masks, n_views)
    out = jax.block_until_ready(out)

    ref = _reference(images, masks)
    assert out.shape == (B, C, H, W)
    assert jnp.allclose(out, ref, atol=1e-6), "mismatch vs reference (small)"

    # ---- secondary sanity check: multi-block grid + non-dividing last block --
    H2 = W2 = 64                                  # rows = 384 -> grid = 3 @ tr=160
    images2 = jax.random.uniform(k_img2, (B, C, H2, W2), dtype=jnp.float32)
    masks2 = (jax.random.uniform(k_msk2, (B, C, H2, W2)) > 0.5).astype(jnp.int8)
    out2 = masked_images_pallas(images2, masks2, tile_rows=160)
    out2 = jax.block_until_ready(out2)
    ref2 = _reference(images2, masks2)
    assert jnp.allclose(out2, ref2, atol=1e-6), "mismatch vs reference (tiled)"

    print("KERNEL_OK")
</pallas_src>

<mosaic_0001>
module attributes {stable_mosaic.version = 11 : i64} {
  func.func @_mask_fuse_kernel(%arg0: i32, %arg1: memref<24x128xf32, #tpu.memory_space<vmem>>, %arg2: memref<24x128xi8, #tpu.memory_space<vmem>>, %arg3: memref<24x128xf32, #tpu.memory_space<vmem>>) attributes {dimension_semantics = [#tpu.dimension_semantics<parallel>], iteration_bounds = array<i64: 1>, scalar_prefetch = 0 : i64, scratch_operands = 0 : i64, tpu.core_type = #tpu.core_type<tc>, window_params = [{transform_indices = @transform_0, window_bounds = array<i64: 24, 128>}, {transform_indices = @transform_1, window_bounds = array<i64: 24, 128>}, {transform_indices = @transform_2, window_bounds = array<i64: 24, 128>}]} {
    %c0 = arith.constant 0 : index
    %c0_0 = arith.constant 0 : index
    %0 = vector.load %arg1[%c0, %c0_0] : memref<24x128xf32, #tpu.memory_space<vmem>>, vector<24x128xf32>
    %c0_1 = arith.constant 0 : index
    %c0_2 = arith.constant 0 : index
    %1 = vector.load %arg2[%c0_1, %c0_2] : memref<24x128xi8, #tpu.memory_space<vmem>>, vector<24x128xi8>
    %2 = arith.sitofp %1 : vector<24x128xi8> to vector<24x128xf32>
    %cst = arith.constant 1.000000e+00 : f32
    %3 = vector.broadcast %cst : f32 to vector<24x128xf32>
    %4 = arith.subf %3, %2 : vector<24x128xf32>
    %5 = arith.mulf %0, %4 : vector<24x128xf32>
    %6 = arith.addf %5, %2 : vector<24x128xf32>
    %c0_3 = arith.constant 0 : index
    %c0_4 = arith.constant 0 : index
    %7 = vector.load %arg3[%c0_3, %c0_4] : memref<24x128xf32, #tpu.memory_space<vmem>>, vector<24x128xf32>
    tpu.vector_store %arg3[%c0_3, %c0_4], %6 {strides = array<i32>} : memref<24x128xf32, #tpu.memory_space<vmem>>, vector<24x128xf32>,
    return
  }
  func.func @transform_0(%arg0: i32) -> (i32, i32) {
    %c0_i32 = arith.constant 0 : i32
    %c0_i32_0 = arith.constant 0 : i32
    return %arg0, %c0_i32 : i32, i32
  }
  func.func @transform_1(%arg0: i32) -> (i32, i32) {
    %c0_i32 = arith.constant 0 : i32
    %c0_i32_0 = arith.constant 0 : i32
    return %arg0, %c0_i32 : i32, i32
  }
  func.func @transform_2(%arg0: i32) -> (i32, i32) {
    %c0_i32 = arith.constant 0 : i32
    %c0_i32_0 = arith.constant 0 : i32
    return %arg0, %c0_i32 : i32, i32
  }
}

</mosaic_0001>

<llo_original>
// kernel: tpu_custom_call.1
$region0: #{tpu_custom_call.1}
  #allocation0 [shape = 'u32[]', space=smem, size = 0x4, offset = 0x4, fixed_abs, tag = 'smem constant byte address 0x4 - core index']
  #allocation1 [shape = 'u32[144,128]{1,0:T(1,128)}', space=vmem, size = 0x12000, scoped, tag = 'internal scratch']
  %s0 = inlined_call_operand.hbm [shape: f32[24,128], index: 0, kind: input, shape index: {}]
  %s1 = inlined_call_operand.hbm [shape: s8[24,128], index: 1, kind: input, shape index: {}]
  %s2 = inlined_call_operand.hbm [shape: f32[24,128], index: 2, kind: output, shape index: {}]
  %s3 = sld [smem:[#allocation0]]
  $region26: #{tpu_custom_call.1} parent=0
    _
  %s5 = ssub.s32 1, %s3
  %s6 = scalar_select 0, %s5, %s3
  $region1: #{tpu_custom_call.1} parent=0
    #allocation2 [shape = 'u8[12288]{0}', space=vmem, size = 0x3000, scoped, tag = 'input window, operand 0, single buffered']
    #allocation3 [shape = 's32[1]{0}', space=sflag, size = 0x4, scoped, tag = 'scoped memory for tpu_custom_call.1']
    #allocation4 [shape = 's32[1]{0}', space=sflag, size = 0x4, scoped, tag = 'scoped memory for tpu_custom_call.1']
    #allocation5 [shape = 'u8[3072]{0}', space=vmem, size = 0xc00, scoped, tag = 'input window, operand 1, single buffered']
    #allocation6 [shape = 's32[1]{0}', space=sflag, size = 0x4, scoped, tag = 'scoped memory for tpu_custom_call.1']
    #allocation7 [shape = 'u8[12288]{0}', space=vmem, size = 0x3000, scoped, tag = 'output window, operand 0, single buffered']
    %7 = vsyncpa [#allocation3], 0
    %8 = vsyncpa [#allocation6], 0
    %9 = vsyncpa [#allocation4], 0
    // Predicated region
    $region2: #{tpu_custom_call.1} parent=1 // pred_check
      _
    $region3: #{tpu_custom_call.1} parent=1 // pred_check_branch
      %11 = sbr.rel (0) target = $region5
    $region4: #{tpu_custom_call.1} parent=1 // pred_region
      %s13 = ssub.s32 384, 384
      %14 = vsyncadd [#allocation3], %s13
      %s15 = sshll.u32 [#allocation2], 4
      %s16 = int_to_ptr.vmem [resolvable:$true] %s15
      %21 = dma.hbm_to_vmem [thread:$0]  %s0, 384, %s16, [#allocation3], 128, 128, 8
    $region5: #{tpu_custom_call.1} parent=1 // pred_fallthru
      _
    // Predicated region
    $region6: #{tpu_custom_call.1} parent=1 // pred_check
      _
    $region7: #{tpu_custom_call.1} parent=1 // pred_check_branch
      %23 = sbr.rel (0) target = $region9
    $region8: #{tpu_custom_call.1} parent=1 // pred_region
      %s25 = ssub.s32 96, 96
      %26 = vsyncadd [#allocation6], %s25
      %s27 = sshll.u32 [#allocation5], 4
      %s28 = int_to_ptr.vmem [resolvable:$true] %s27
      %33 = dma.hbm_to_vmem [thread:$0]  %s1, 96, %s28, [#allocation6], 32, 32, 2
    $region9: #{tpu_custom_call.1} parent=1 // pred_fallthru
      _
    // Predicated region
    $region10: #{tpu_custom_call.1} parent=1 // pred_check
      _
    $region11: #{tpu_custom_call.1} parent=1 // pred_check_branch
      %35 = sbr.rel (0) target = $region13
    $region12: #{tpu_custom_call.1} parent=1 // pred_region
      %36 = dma.done [#allocation3], 384
    $region13: #{tpu_custom_call.1} parent=1 // pred_fallthru
      _
    // Predicated region
    $region14: #{tpu_custom_call.1} parent=1 // pred_check
      _
    $region15: #{tpu_custom_call.1} parent=1 // pred_check_branch
      %38 = sbr.rel (0) target = $region17
    $region16: #{tpu_custom_call.1} parent=1 // pred_region
      %39 = dma.done [#allocation6], 96
    $region17: #{tpu_custom_call.1} parent=1 // pred_fallthru
      _
    %v40 = vld [vmem:[#allocation2] sm:$0xff]
    %v41 = vld [vmem:[#allocation2 + $0x8] sm:$0xff]
    %v42 = vld [vmem:[#allocation2 + $0x10] sm:$0xff]
    %v43 = vld [vmem:[#allocation5] sm:$0x3]
    %v44 = vld [vmem:[#allocation5 + $0x2] sm:$0x3]
    %v45 = vld [vmem:[#allocation5 + $0x4] sm:$0x3]
    %v46 = vunpack.c.0.s8 %v43
    %v47 = vunpack.c.0.s8 %v44
    %v48 = vunpack.c.0.s8 %v45
    %v49 = vcvt.s32.f32 %v46
    %v50 = vcvt.s32.f32 %v47
    %v51 = vcvt.s32.f32 %v48
    %v52 = vsub.f32 1.0, %v49
    %v53 = vsub.f32 1.0, %v50
    %v54 = vsub.f32 1.0, %v51
    %v55 = vmul.f32 %v40, %v52
    %v56 = vmul.f32 %v41, %v53
    %v57 = vmul.f32 %v42, %v54
    %v58 = vadd.f32 %v55, %v49
    %v59 = vadd.f32 %v56, %v50
    %v60 = vadd.f32 %v57, %v51
    %61 = vst [vmem:[#allocation7] sm:$0xff] %v58
    %62 = vst [vmem:[#allocation7 + $0x8] sm:$0xff] %v59
    %63 = vst [vmem:[#allocation7 + $0x10] sm:$0xff] %v60
    // Predicated region
    $region18: #{tpu_custom_call.1} parent=1 // pred_check
      _
    $region19: #{tpu_custom_call.1} parent=1 // pred_check_branch
      %65 = sbr.rel (0) target = $region21
    $region20: #{tpu_custom_call.1} parent=1 // pred_region
      %s67 = ssub.s32 384, 384
      %68 = vsyncadd [#allocation4], %s67
      %s69 = sshll.u32 [#allocation7], 4
      %s70 = int_to_ptr.vmem [resolvable:$true] %s69
      %75 = dma.vmem_to_hbm [thread:$0]  %s70, 384, %s2, [#allocation4], 128, 128, 8
    $region21: #{tpu_custom_call.1} parent=1 // pred_fallthru
      _
    // Predicated region
    $region22: #{tpu_custom_call.1} parent=1 // pred_check
      _
    $region23: #{tpu_custom_call.1} parent=1 // pred_check_branch
      %77 = sbr.rel (0) target = $region25
    $region24: #{tpu_custom_call.1} parent=1 // pred_region
      %78 = dma.done [#allocation4], 384
    $region25: #{tpu_custom_call.1} parent=1 // pred_fallthru
      _
    %79 = vsyncpa [#allocation3], 1
    %80 = vsyncpa [#allocation6], 1
    %81 = vsyncpa [#allocation4], 1

</llo_original>
